<compile_context>
chip_gen: v5e
topology: v5e:2x2
jax: 0.10.0
libtpu: 0.0.40
codegen_flags: <defaults>
</compile_context>

<pallas_src>
import numpy as np
import jax
import jax.numpy as jnp
from jax.experimental import pallas as pl
from jax.experimental.pallas import tpu as pltpu

# ----------------------------- configuration -------------------------------
N_AGENTS = 8
STATE_DIM = 32
AGENT_OWN = 4                        # agent_own_state_size (AGENT_OWN*N_AGENTS <= STATE_DIM)
NQ1 = 64                             # n_query_embedding_layer1
NQ2 = 32                             # n_query_embedding_layer2
NK1 = 32                             # n_key_embedding_layer1
NHEADS = 4                           # num_attention_heads
NC = 32                              # n_constrant_value
SCALE = float(np.sqrt(NQ2))          # scaled_product_value

F_IN = STATE_DIM + N_AGENTS + 1      # 41 rows: [states | agent_qs | ones]
F1 = NHEADS * NQ1 + NC               # 288 packed layer-1 rows (query heads + constrant)
L2R = 24                             # packed layer-2 rows: 16 G + 4 beta + 1 c + 3 pad
GA_ROWS = NHEADS * N_AGENTS * AGENT_OWN   # 128 replicated G rows
HA = NHEADS * N_AGENTS               # 32 (head, agent) pairs


# ------------------------------- kernel ------------------------------------
def qatten_kernel(x_ref, w1_ref, w2_ref, b2_ref, rep_ref, r8_ref, out_ref):
    x = x_ref[...]                                            # (41, tb) bf16
    s_own = x[0:STATE_DIM, :].astype(jnp.float32)             # (32, tb)
    aq = x[STATE_DIM:STATE_DIM + N_AGENTS, :].astype(jnp.float32)   # (8, tb)

    # packed layer 1 (query heads + constrant layer-1), biases folded via ones row
    h1 = jnp.maximum(
        jnp.dot(w1_ref[...], x, preferred_element_type=jnp.float32), 0.0)   # (288, tb)
    h1b = h1.astype(jnp.bfloat16)

    # fused layer 2 (K=288, tiny M): rows 0..15 = (wk o wq2)/sqrt(d) "G",
    # rows 16..19 = (bk . se2)/sqrt(d) "beta", row 20 = constrant head.
    l2 = jnp.dot(w2_ref[...], h1b,
                 preferred_element_type=jnp.float32) + b2_ref[...]          # (24, tb)
    c_row = l2[20:21, :]                                                    # (1, tb)

    # replicate G across agents and beta across (head, agent) via a 0/1 matmul
    gb = jnp.dot(rep_ref[...], l2.astype(jnp.bfloat16),
                 preferred_element_type=jnp.float32)                        # (160, tb)

    r8 = r8_ref[...]                                                        # (8, 32)

    # per-head: group-of-4 contraction of G against agent-own state rows,
    # then a per-head (max-stabilized) softmax over agents.
    lam_sum = None
    for h in range(NHEADS):
        ga_h = gb[h * 32:(h + 1) * 32, :]                                   # (32, tb)
        beta_h = gb[GA_ROWS + h * N_AGENTS:GA_ROWS + (h + 1) * N_AGENTS, :] # (8, tb)
        p_h = (ga_h * s_own).astype(jnp.bfloat16)                           # (32, tb)
        logit_h = jnp.dot(r8, p_h,
                          preferred_element_type=jnp.float32) + beta_h      # (8, tb)
        m = jnp.max(logit_h, axis=0, keepdims=True)                         # (1, tb)
        e = jnp.exp(logit_h - m)
        d = jnp.sum(e, axis=0, keepdims=True)                               # >= 1
        lam_h = e * pl.reciprocal(d, approx=True)                           # (8, tb)
        lam_sum = lam_h if lam_sum is None else lam_sum + lam_h             # sum over heads

    # sum_q[b] = sum_h sum_a lam[h, a, b] * aq[a, b]
    sum_q = jnp.sum(lam_sum * aq, axis=0, keepdims=True)                    # (1, tb)

    out_ref[...] = sum_q + c_row                                            # (1, tb)


# --------------------------- weight packing ---------------------------------
def _pack_params(params):
    (wq1, bq1, wq2, bq2, wk, bk, wc1, bc1, wc2, bc2) = [
        np.asarray(p, np.float64) for p in params]
    inv = 1.0 / SCALE

    # layer 1: [query heads | constrant layer-1], bias in the last (ones) column
    w1 = np.zeros((F1, F_IN), np.float64)
    for h in range(NHEADS):
        rows = slice(h * NQ1, (h + 1) * NQ1)
        w1[rows, :STATE_DIM] = wq1[h].T
        w1[rows, F_IN - 1] = bq1[h]
    w1[NHEADS * NQ1:, :STATE_DIM] = wc1.T
    w1[NHEADS * NQ1:, F_IN - 1] = bc1.reshape(-1)

    # fused layer 2: G (key projection folded onto query side), beta, constrant
    w2 = np.zeros((L2R, F1), np.float64)
    b2 = np.zeros((L2R, 1), np.float64)
    for h in range(NHEADS):
        cols = slice(h * NQ1, (h + 1) * NQ1)
        w2[h * AGENT_OWN:(h + 1) * AGENT_OWN, cols] = inv * (wk[h] @ wq2[h].T)
        b2[h * AGENT_OWN:(h + 1) * AGENT_OWN, 0] = inv * (wk[h] @ bq2[h])
        w2[16 + h, cols] = inv * (wq2[h] @ bk[h])
        b2[16 + h, 0] = inv * float(bk[h] @ bq2[h])
    w2[20, NHEADS * NQ1:] = wc2.reshape(-1)
    b2[20, 0] = float(np.asarray(bc2).reshape(-1)[0])

    # 0/1 replication matrix: GA[h*32+a*4+c] = G[h*4+c], beta32[h*8+a] = beta[h]
    rep = np.zeros((GA_ROWS + HA, L2R), np.float64)
    # 0/1 group-of-4 reduce matrix shared by all heads: r8[a, a*4+c] = 1
    r8 = np.zeros((N_AGENTS, STATE_DIM), np.float64)
    for h in range(NHEADS):
        for a in range(N_AGENTS):
            for c in range(AGENT_OWN):
                rep[h * 32 + a * AGENT_OWN + c, h * AGENT_OWN + c] = 1.0
            rep[GA_ROWS + h * N_AGENTS + a, 16 + h] = 1.0
    for a in range(N_AGENTS):
        for c in range(AGENT_OWN):
            r8[a, a * AGENT_OWN + c] = 1.0

    return (jnp.asarray(w1, jnp.bfloat16),
            jnp.asarray(w2, jnp.bfloat16),
            jnp.asarray(b2, jnp.float32),
            jnp.asarray(rep, jnp.bfloat16),
            jnp.asarray(r8, jnp.bfloat16))


# ------------------------------- wrapper ------------------------------------
def _round_up(x, m):
    return ((x + m - 1) // m) * m


def qatten_mixer(agent_qs, states, params, *, tb=2048):
    """agent_qs: (bs, T, n_agents)  states: (bs, T, state_dim) -> (bs, T, 1)"""
    bs, T, A = agent_qs.shape
    assert A == N_AGENTS and states.shape[-1] == STATE_DIM
    B = bs * T

    # lane-width multiple of 128; cap at ~B/2 so the grid has >= 2 parallel
    # steps whenever possible (v7x: 2 TensorCores).
    cap = _round_up(max((B + 1) // 2, 1), 128)
    tb_eff = max(128, min(_round_up(tb, 128), cap))
    Bp = _round_up(B, tb_eff)
    grid = Bp // tb_eff

    # fused, transposed activation slab (batch along lanes): [states | qs | 1]
    s_t = states.reshape(B, STATE_DIM).astype(jnp.float32).T      # (32, B)
    aq_t = agent_qs.reshape(B, A).astype(jnp.float32).T           # (8,  B)
    ones = jnp.ones((1, B), jnp.float32)
    x = jnp.concatenate([s_t, aq_t, ones], axis=0).astype(jnp.bfloat16)   # (41, B)
    if Bp > B:
        x = jnp.pad(x, ((0, 0), (0, Bp - B)))

    packed = _pack_params(params)

    def full(a):
        return pl.BlockSpec(a.shape, lambda i: (0, 0))   # all packed weights are 2-D

    out = pl.pallas_call(
        qatten_kernel,
        out_shape=jax.ShapeDtypeStruct((1, Bp), jnp.float32),
        grid=(grid,),
        in_specs=[pl.BlockSpec((F_IN, tb_eff), lambda i: (0, i))]
                 + [full(w) for w in packed],
        out_specs=pl.BlockSpec((1, tb_eff), lambda i: (0, i)),   # lane-dense output
        compiler_params=pltpu.CompilerParams(
            dimension_semantics=("parallel",),
            vmem_limit_bytes=32 * 1024 * 1024),
    )(x, *packed)

    return out[0, :B].reshape(bs, T, 1)


# --------------------------- pure-JAX reference ------------------------------
def qatten_reference(agent_qs, states, params):
    (wq1, bq1, wq2, bq2, wk, bk, wc1, bc1, wc2, bc2) = params
    bs, T, A = agent_qs.shape
    B = bs * T
    s = states.reshape(B, STATE_DIM)
    aq = agent_qs.reshape(B, 1, A)
    us = s[:, :AGENT_OWN * A].reshape(B * A, AGENT_OWN)

    lam_list = []
    for h in range(NHEADS):
        se = jnp.maximum(s @ wq1[h] + bq1[h], 0.0) @ wq2[h] + bq2[h]     # (B, NQ2)
        ue = (us @ wk[h] + bk[h]).reshape(B, A, NK1)                     # (B, A, NK1)
        raw = jnp.einsum('bd,bad->ba', se, ue)[:, None, :] / SCALE       # (B, 1, A)
        lam_list.append(jax.nn.softmax(raw, axis=-1))
    lam = jnp.stack(lam_list, axis=1).squeeze(-2)                        # (B, H, A)
    lam = jnp.transpose(lam, (0, 2, 1))                                  # (B, A, H)
    q_h = jnp.matmul(aq, lam)                                            # (B, 1, H)
    sum_q_h = q_h.sum(-1).reshape(-1, 1)                                 # (B, 1)
    c = jnp.maximum(s @ wc1 + bc1, 0.0) @ wc2 + bc2                      # (B, 1)
    return (sum_q_h + c).reshape(bs, T, 1)


# ------------------------------- params -------------------------------------
def init_params(key):
    ks = jax.random.split(key, 10)
    scale = 0.1
    wq1 = scale * jax.random.normal(ks[0], (NHEADS, STATE_DIM, NQ1), jnp.float32)
    bq1 = scale * jax.random.normal(ks[1], (NHEADS, NQ1), jnp.float32)
    wq2 = scale * jax.random.normal(ks[2], (NHEADS, NQ1, NQ2), jnp.float32)
    bq2 = scale * jax.random.normal(ks[3], (NHEADS, NQ2), jnp.float32)
    wk = scale * jax.random.normal(ks[4], (NHEADS, AGENT_OWN, NK1), jnp.float32)
    bk = scale * jax.random.normal(ks[5], (NHEADS, NK1), jnp.float32)
    wc1 = scale * jax.random.normal(ks[6], (STATE_DIM, NC), jnp.float32)
    bc1 = scale * jax.random.normal(ks[7], (1, NC), jnp.float32)
    wc2 = scale * jax.random.normal(ks[8], (NC, 1), jnp.float32)
    bc2 = scale * jax.random.normal(ks[9], (1, 1), jnp.float32)
    # TODO(synk): head_embedding_layer params omitted — the 'weighted' branch is
    # unreachable in the PyTorch forward (self.type is nn.Module.type, a method).
    return (wq1, bq1, wq2, bq2, wk, bk, wc1, bc1, wc2, bc2)


if __name__ == "__main__":
    key = jax.random.PRNGKey(0)
    kp, ka, ks_ = jax.random.split(key, 3)
    params = init_params(kp)

    # small shape (module-consistent demo sizes)
    bs, T = 2, 4
    agent_qs = jax.random.normal(ka, (bs, T, N_AGENTS), jnp.float32)
    states = jax.random.normal(ks_, (bs, T, STATE_DIM), jnp.float32)
    q_tot = jax.block_until_ready(qatten_mixer(agent_qs, states, params))
    q_ref = qatten_reference(agent_qs, states, params)
    # bf16 matmul inputs (f32 accumulation) -> loosened tolerance vs f32 reference
    np.testing.assert_allclose(np.asarray(q_tot), np.asarray(q_ref),
                               rtol=3e-2, atol=3e-2)
    assert q_tot.shape == (bs, T, 1)

    # larger batch exercising a multi-step grid (both TensorCores on v7x)
    ka2, ks2 = jax.random.split(jax.random.PRNGKey(1), 2)
    bs2, T2 = 8, 256
    aq_big = jax.random.normal(ka2, (bs2, T2, N_AGENTS), jnp.float32)
    st_big = jax.random.normal(ks2, (bs2, T2, STATE_DIM), jnp.float32)
    q_big = jax.block_until_ready(qatten_mixer(aq_big, st_big, params))
    q_big_ref = qatten_reference(aq_big, st_big, params)
    np.testing.assert_allclose(np.asarray(q_big), np.asarray(q_big_ref),
                               rtol=3e-2, atol=3e-2)

    print("KERNEL_OK")
</pallas_src>

<mosaic_0001>
module attributes {stable_mosaic.version = 11 : i64} {
  func.func @qatten_kernel(%arg0: i32, %arg1: memref<41x128xbf16, #tpu.memory_space<vmem>>, %arg2: memref<288x41xbf16, #tpu.memory_space<vmem>>, %arg3: memref<24x288xbf16, #tpu.memory_space<vmem>>, %arg4: memref<24x1xf32, #tpu.memory_space<vmem>>, %arg5: memref<160x24xbf16, #tpu.memory_space<vmem>>, %arg6: memref<8x32xbf16, #tpu.memory_space<vmem>>, %arg7: memref<1x128xf32, #tpu.memory_space<vmem>>) attributes {dimension_semantics = [#tpu.dimension_semantics<parallel>], iteration_bounds = array<i64: 1>, scalar_prefetch = 0 : i64, scratch_operands = 0 : i64, tpu.core_type = #tpu.core_type<tc>, window_params = [{transform_indices = @transform_0, window_bounds = array<i64: 41, 128>}, {pipeline_mode = #tpu.pipeline_mode<synchronous>, transform_indices = @transform_1, window_bounds = array<i64: 288, 41>}, {pipeline_mode = #tpu.pipeline_mode<synchronous>, transform_indices = @transform_2, window_bounds = array<i64: 24, 288>}, {pipeline_mode = #tpu.pipeline_mode<synchronous>, transform_indices = @transform_3, window_bounds = array<i64: 24, 1>}, {pipeline_mode = #tpu.pipeline_mode<synchronous>, transform_indices = @transform_4, window_bounds = array<i64: 160, 24>}, {pipeline_mode = #tpu.pipeline_mode<synchronous>, transform_indices = @transform_5, window_bounds = array<i64: 8, 32>}, {transform_indices = @transform_6, window_bounds = array<i64: 1, 128>}]} {
    %c0 = arith.constant 0 : index
    %c0_0 = arith.constant 0 : index
    %0 = vector.load %arg1[%c0, %c0_0] : memref<41x128xbf16, #tpu.memory_space<vmem>>, vector<41x128xbf16>
    %1 = vector.extract_strided_slice %0 {offsets = [0, 0], sizes = [32, 128], strides = [1, 1]} : vector<41x128xbf16> to vector<32x128xbf16>
    %2 = arith.extf %1 : vector<32x128xbf16> to vector<32x128xf32>
    %3 = vector.extract_strided_slice %0 {offsets = [32, 0], sizes = [8, 128], strides = [1, 1]} : vector<41x128xbf16> to vector<8x128xbf16>
    %4 = arith.extf %3 : vector<8x128xbf16> to vector<8x128xf32>
    %c0_1 = arith.constant 0 : index
    %c0_2 = arith.constant 0 : index
    %5 = vector.load %arg2[%c0_1, %c0_2] : memref<288x41xbf16, #tpu.memory_space<vmem>>, vector<288x41xbf16>
    %cst = arith.constant dense<0.000000e+00> : vector<288x128xf32>
    %6 = tpu.matmul %5, %0, %cst {dimension_numbers = #tpu.dot_dimension_numbers<[1], [0], [0], [1], [0, 0, 1, 1], [], []>} : vector<288x41xbf16>, vector<41x128xbf16>, vector<288x128xf32> -> vector<288x128xf32>
    %cst_3 = arith.constant 0.000000e+00 : f32
    %7 = vector.broadcast %cst_3 : f32 to vector<288x128xf32>
    %8 = arith.maximumf %6, %7 : vector<288x128xf32>
    %9 = arith.truncf %8 : vector<288x128xf32> to vector<288x128xbf16>
    %c0_4 = arith.constant 0 : index
    %c0_5 = arith.constant 0 : index
    %10 = vector.load %arg3[%c0_4, %c0_5] : memref<24x288xbf16, #tpu.memory_space<vmem>>, vector<24x288xbf16>
    %cst_6 = arith.constant dense<0.000000e+00> : vector<24x128xf32>
    %11 = tpu.matmul %10, %9, %cst_6 {dimension_numbers = #tpu.dot_dimension_numbers<[1], [0], [0], [1], [0, 0, 1, 1], [], []>} : vector<24x288xbf16>, vector<288x128xbf16>, vector<24x128xf32> -> vector<24x128xf32>
    %c0_7 = arith.constant 0 : index
    %c0_8 = arith.constant 0 : index
    %12 = vector.load %arg4[%c0_7, %c0_8] : memref<24x1xf32, #tpu.memory_space<vmem>>, vector<24x1xf32>
    %13 = vector.broadcast %12 : vector<24x1xf32> to vector<24x128xf32>
    %14 = arith.addf %11, %13 : vector<24x128xf32>
    %15 = vector.extract_strided_slice %14 {offsets = [20, 0], sizes = [1, 128], strides = [1, 1]} : vector<24x128xf32> to vector<1x128xf32>
    %c0_9 = arith.constant 0 : index
    %c0_10 = arith.constant 0 : index
    %16 = vector.load %arg5[%c0_9, %c0_10] : memref<160x24xbf16, #tpu.memory_space<vmem>>, vector<160x24xbf16>
    %17 = arith.truncf %14 : vector<24x128xf32> to vector<24x128xbf16>
    %cst_11 = arith.constant dense<0.000000e+00> : vector<160x128xf32>
    %18 = tpu.matmul %16, %17, %cst_11 {dimension_numbers = #tpu.dot_dimension_numbers<[1], [0], [0], [1], [0, 0, 1, 1], [], []>} : vector<160x24xbf16>, vector<24x128xbf16>, vector<160x128xf32> -> vector<160x128xf32>
    %c0_12 = arith.constant 0 : index
    %c0_13 = arith.constant 0 : index
    %19 = vector.load %arg6[%c0_12, %c0_13] : memref<8x32xbf16, #tpu.memory_space<vmem>>, vector<8x32xbf16>
    %20 = vector.extract_strided_slice %18 {offsets = [0, 0], sizes = [32, 128], strides = [1, 1]} : vector<160x128xf32> to vector<32x128xf32>
    %21 = vector.extract_strided_slice %18 {offsets = [128, 0], sizes = [8, 128], strides = [1, 1]} : vector<160x128xf32> to vector<8x128xf32>
    %22 = arith.mulf %20, %2 : vector<32x128xf32>
    %23 = arith.truncf %22 : vector<32x128xf32> to vector<32x128xbf16>
    %cst_14 = arith.constant dense<0.000000e+00> : vector<8x128xf32>
    %24 = tpu.matmul %19, %23, %cst_14 {dimension_numbers = #tpu.dot_dimension_numbers<[1], [0], [0], [1], [0, 0, 1, 1], [], []>} : vector<8x32xbf16>, vector<32x128xbf16>, vector<8x128xf32> -> vector<8x128xf32>
    %25 = arith.addf %24, %21 : vector<8x128xf32>
    %cst_15 = arith.constant dense<0xFF800000> : vector<128xf32>
    %26 = vector.multi_reduction <maximumf>, %25, %cst_15 [0] : vector<8x128xf32> to vector<128xf32>
    %27 = vector.shape_cast %26 : vector<128xf32> to vector<1x128xf32>
    %28 = vector.broadcast %27 : vector<1x128xf32> to vector<8x128xf32>
    %29 = arith.subf %25, %28 : vector<8x128xf32>
    %30 = math.exp %29 : vector<8x128xf32>
    %cst_16 = arith.constant dense<0.000000e+00> : vector<128xf32>
    %31 = vector.multi_reduction <add>, %30, %cst_16 [0] : vector<8x128xf32> to vector<128xf32>
    %32 = vector.shape_cast %31 : vector<128xf32> to vector<1x128xf32>
    %33 = tpu.reciprocal %32 {approx = true} : vector<1x128xf32> -> vector<1x128xf32>
    %34 = vector.broadcast %33 : vector<1x128xf32> to vector<8x128xf32>
    %35 = arith.mulf %30, %34 : vector<8x128xf32>
    %36 = vector.extract_strided_slice %18 {offsets = [32, 0], sizes = [32, 128], strides = [1, 1]} : vector<160x128xf32> to vector<32x128xf32>
    %37 = vector.extract_strided_slice %18 {offsets = [136, 0], sizes = [8, 128], strides = [1, 1]} : vector<160x128xf32> to vector<8x128xf32>
    %38 = arith.mulf %36, %2 : vector<32x128xf32>
    %39 = arith.truncf %38 : vector<32x128xf32> to vector<32x128xbf16>
    %cst_17 = arith.constant dense<0.000000e+00> : vector<8x128xf32>
    %40 = tpu.matmul %19, %39, %cst_17 {dimension_numbers = #tpu.dot_dimension_numbers<[1], [0], [0], [1], [0, 0, 1, 1], [], []>} : vector<8x32xbf16>, vector<32x128xbf16>, vector<8x128xf32> -> vector<8x128xf32>
    %41 = arith.addf %40, %37 : vector<8x128xf32>
    %cst_18 = arith.constant dense<0xFF800000> : vector<128xf32>
    %42 = vector.multi_reduction <maximumf>, %41, %cst_18 [0] : vector<8x128xf32> to vector<128xf32>
    %43 = vector.shape_cast %42 : vector<128xf32> to vector<1x128xf32>
    %44 = vector.broadcast %43 : vector<1x128xf32> to vector<8x128xf32>
    %45 = arith.subf %41, %44 : vector<8x128xf32>
    %46 = math.exp %45 : vector<8x128xf32>
    %cst_19 = arith.constant dense<0.000000e+00> : vector<128xf32>
    %47 = vector.multi_reduction <add>, %46, %cst_19 [0] : vector<8x128xf32> to vector<128xf32>
    %48 = vector.shape_cast %47 : vector<128xf32> to vector<1x128xf32>
    %49 = tpu.reciprocal %48 {approx = true} : vector<1x128xf32> -> vector<1x128xf32>
    %50 = vector.broadcast %49 : vector<1x128xf32> to vector<8x128xf32>
    %51 = arith.mulf %46, %50 : vector<8x128xf32>
    %52 = arith.addf %35, %51 : vector<8x128xf32>
    %53 = vector.extract_strided_slice %18 {offsets = [64, 0], sizes = [32, 128], strides = [1, 1]} : vector<160x128xf32> to vector<32x128xf32>
    %54 = vector.extract_strided_slice %18 {offsets = [144, 0], sizes = [8, 128], strides = [1, 1]} : vector<160x128xf32> to vector<8x128xf32>
    %55 = arith.mulf %53, %2 : vector<32x128xf32>
    %56 = arith.truncf %55 : vector<32x128xf32> to vector<32x128xbf16>
    %cst_20 = arith.constant dense<0.000000e+00> : vector<8x128xf32>
    %57 = tpu.matmul %19, %56, %cst_20 {dimension_numbers = #tpu.dot_dimension_numbers<[1], [0], [0], [1], [0, 0, 1, 1], [], []>} : vector<8x32xbf16>, vector<32x128xbf16>, vector<8x128xf32> -> vector<8x128xf32>
    %58 = arith.addf %57, %54 : vector<8x128xf32>
    %cst_21 = arith.constant dense<0xFF800000> : vector<128xf32>
    %59 = vector.multi_reduction <maximumf>, %58, %cst_21 [0] : vector<8x128xf32> to vector<128xf32>
    %60 = vector.shape_cast %59 : vector<128xf32> to vector<1x128xf32>
    %61 = vector.broadcast %60 : vector<1x128xf32> to vector<8x128xf32>
    %62 = arith.subf %58, %61 : vector<8x128xf32>
    %63 = math.exp %62 : vector<8x128xf32>
    %cst_22 = arith.constant dense<0.000000e+00> : vector<128xf32>
    %64 = vector.multi_reduction <add>, %63, %cst_22 [0] : vector<8x128xf32> to vector<128xf32>
    %65 = vector.shape_cast %64 : vector<128xf32> to vector<1x128xf32>
    %66 = tpu.reciprocal %65 {approx = true} : vector<1x128xf32> -> vector<1x128xf32>
    %67 = vector.broadcast %66 : vector<1x128xf32> to vector<8x128xf32>
    %68 = arith.mulf %63, %67 : vector<8x128xf32>
    %69 = arith.addf %52, %68 : vector<8x128xf32>
    %70 = vector.extract_strided_slice %18 {offsets = [96, 0], sizes = [32, 128], strides = [1, 1]} : vector<160x128xf32> to vector<32x128xf32>
    %71 = vector.extract_strided_slice %18 {offsets = [152, 0], sizes = [8, 128], strides = [1, 1]} : vector<160x128xf32> to vector<8x128xf32>
    %72 = arith.mulf %70, %2 : vector<32x128xf32>
    %73 = arith.truncf %72 : vector<32x128xf32> to vector<32x128xbf16>
    %cst_23 = arith.constant dense<0.000000e+00> : vector<8x128xf32>
    %74 = tpu.matmul %19, %73, %cst_23 {dimension_numbers = #tpu.dot_dimension_numbers<[1], [0], [0], [1], [0, 0, 1, 1], [], []>} : vector<8x32xbf16>, vector<32x128xbf16>, vector<8x128xf32> -> vector<8x128xf32>
    %75 = arith.addf %74, %71 : vector<8x128xf32>
    %cst_24 = arith.constant dense<0xFF800000> : vector<128xf32>
    %76 = vector.multi_reduction <maximumf>, %75, %cst_24 [0] : vector<8x128xf32> to vector<128xf32>
    %77 = vector.shape_cast %76 : vector<128xf32> to vector<1x128xf32>
    %78 = vector.broadcast %77 : vector<1x128xf32> to vector<8x128xf32>
    %79 = arith.subf %75, %78 : vector<8x128xf32>
    %80 = math.exp %79 : vector<8x128xf32>
    %cst_25 = arith.constant dense<0.000000e+00> : vector<128xf32>
    %81 = vector.multi_reduction <add>, %80, %cst_25 [0] : vector<8x128xf32> to vector<128xf32>
    %82 = vector.shape_cast %81 : vector<128xf32> to vector<1x128xf32>
    %83 = tpu.reciprocal %82 {approx = true} : vector<1x128xf32> -> vector<1x128xf32>
    %84 = vector.broadcast %83 : vector<1x128xf32> to vector<8x128xf32>
    %85 = arith.mulf %80, %84 : vector<8x128xf32>
    %86 = arith.addf %69, %85 : vector<8x128xf32>
    %87 = arith.mulf %86, %4 : vector<8x128xf32>
    %cst_26 = arith.constant dense<0.000000e+00> : vector<128xf32>
    %88 = vector.multi_reduction <add>, %87, %cst_26 [0] : vector<8x128xf32> to vector<128xf32>
    %89 = vector.shape_cast %88 : vector<128xf32> to vector<1x128xf32>
    %90 = arith.addf %89, %15 : vector<1x128xf32>
    %c0_27 = arith.constant 0 : index
    %c0_28 = arith.constant 0 : index
    %91 = vector.load %arg7[%c0_27, %c0_28] : memref<1x128xf32, #tpu.memory_space<vmem>>, vector<1x128xf32>
    tpu.vector_store %arg7[%c0_27, %c0_28], %90 {strides = array<i32>} : memref<1x128xf32, #tpu.memory_space<vmem>>, vector<1x128xf32>,
    return
  }
  func.func @transform_0(%arg0: i32) -> (i32, i32) {
    %c0_i32 = arith.constant 0 : i32
    %c0_i32_0 = arith.constant 0 : i32
    return %c0_i32, %arg0 : i32, i32
  }
  func.func @transform_1(%arg0: i32) -> (i32, i32) {
    %c0_i32 = arith.constant 0 : i32
    %c0_i32_0 = arith.constant 0 : i32
    %c0_i32_1 = arith.constant 0 : i32
    return %c0_i32, %c0_i32_0 : i32, i32
  }
  func.func @transform_2(%arg0: i32) -> (i32, i32) {
    %c0_i32 = arith.constant 0 : i32
    %c0_i32_0 = arith.constant 0 : i32
    %c0_i32_1 = arith.constant 0 : i32
    return %c0_i32, %c0_i32_0 : i32, i32
  }
  func.func @transform_3(%arg0: i32) -> (i32, i32) {
    %c0_i32 = arith.constant 0 : i32
    %c0_i32_0 = arith.constant 0 : i32
    %c0_i32_1 = arith.constant 0 : i32
    return %c0_i32, %c0_i32_0 : i32, i32
  }
  func.func @transform_4(%arg0: i32) -> (i32, i32) {
    %c0_i32 = arith.constant 0 : i32
    %c0_i32_0 = arith.constant 0 : i32
    %c0_i32_1 = arith.constant 0 : i32
    return %c0_i32, %c0_i32_0 : i32, i32
  }
  func.func @transform_5(%arg0: i32) -> (i32, i32) {
    %c0_i32 = arith.constant 0 : i32
    %c0_i32_0 = arith.constant 0 : i32
    %c0_i32_1 = arith.constant 0 : i32
    return %c0_i32, %c0_i32_0 : i32, i32
  }
  func.func @transform_6(%arg0: i32) -> (i32, i32) {
    %c0_i32 = arith.constant 0 : i32
    %c0_i32_0 = arith.constant 0 : i32
    return %c0_i32, %arg0 : i32, i32
  }
}

</mosaic_0001>

<llo_original>
// kernel: tpu_custom_call.1
$region0: #{tpu_custom_call.1}
  #allocation0 [shape = 'u32[]', space=smem, size = 0x4, offset = 0x4, fixed_abs, tag = 'smem constant byte address 0x4 - core index']
  #allocation1 [shape = 'u32[72,128]{1,0:T(1,128)}', space=vmem, size = 0x9000, scoped, tag = 'internal scratch']
  %s0 = inlined_call_operand.vmem [shape: bf16[41,128], index: 0, kind: input, shape index: {}]
  %s1 = inlined_call_operand.vmem [shape: bf16[288,41], index: 1, kind: input, shape index: {}]
  %s2 = inlined_call_operand.vmem [shape: bf16[24,288], index: 2, kind: input, shape index: {}]
  %s3 = inlined_call_operand.vmem [shape: f32[24,1], index: 3, kind: input, shape index: {}]
  %s4 = inlined_call_operand.vmem [shape: bf16[160,24], index: 4, kind: input, shape index: {}]
  %s5 = inlined_call_operand.vmem [shape: bf16[8,32], index: 5, kind: input, shape index: {}]
  %s6 = inlined_call_operand.hbm [shape: f32[1,128], index: 6, kind: output, shape index: {}]
  %s7 = sld [smem:[#allocation0]]
  $region34: #{tpu_custom_call.1} parent=0
    _
  %s9 = ssub.s32 1, %s7
  %s10 = scalar_select 0, %s9, %s7
  $region1: #{tpu_custom_call.1} parent=0
    #allocation2 [shape = 'u8[512]{0}', space=vmem, size = 0x400, scoped, tag = 'output window, operand 0, single buffered']
    #allocation3 [shape = 's32[1]{0}', space=sflag, size = 0x4, scoped, tag = 'scoped memory for tpu_custom_call.1']
    %11 = vsyncpa [#allocation3], 0
    // Predicated region
    $region2: #{tpu_custom_call.1} parent=1 // pred_check
      _
    $region3: #{tpu_custom_call.1} parent=1 // pred_check_branch
      %13 = sbr.rel (0) target = $region5
    $region4: #{tpu_custom_call.1} parent=1 // pred_region
      _
    $region5: #{tpu_custom_call.1} parent=1 // pred_fallthru
      _
    // Predicated region
    $region6: #{tpu_custom_call.1} parent=1 // pred_check
      _
    $region7: #{tpu_custom_call.1} parent=1 // pred_check_branch
      %15 = sbr.rel (0) target = $region9
    $region8: #{tpu_custom_call.1} parent=1 // pred_region
      _
    $region9: #{tpu_custom_call.1} parent=1 // pred_fallthru
      _
    // Predicated region
    $region10: #{tpu_custom_call.1} parent=1 // pred_check
      _
    $region11: #{tpu_custom_call.1} parent=1 // pred_check_branch
      %17 = sbr.rel (0) target = $region13
    $region12: #{tpu_custom_call.1} parent=1 // pred_region
      _
    $region13: #{tpu_custom_call.1} parent=1 // pred_fallthru
      _
    // Predicated region
    $region14: #{tpu_custom_call.1} parent=1 // pred_check
      _
    $region15: #{tpu_custom_call.1} parent=1 // pred_check_branch
      %19 = sbr.rel (0) target = $region17
    $region16: #{tpu_custom_call.1} parent=1 // pred_region
      _
    $region17: #{tpu_custom_call.1} parent=1 // pred_fallthru
      _
    // Predicated region
    $region18: #{tpu_custom_call.1} parent=1 // pred_check
      _
    $region19: #{tpu_custom_call.1} parent=1 // pred_check_branch
      %21 = sbr.rel (0) target = $region21
    $region20: #{tpu_custom_call.1} parent=1 // pred_region
      _
    $region21: #{tpu_custom_call.1} parent=1 // pred_fallthru
      _
    // Predicated region
    $region22: #{tpu_custom_call.1} parent=1 // pred_check
      _
    $region23: #{tpu_custom_call.1} parent=1 // pred_check_branch
      %23 = sbr.rel (0) target = $region25
    $region24: #{tpu_custom_call.1} parent=1 // pred_region
      _
    $region25: #{tpu_custom_call.1} parent=1 // pred_fallthru
      _
    %v25 = vld [vmem:[%s0] sm:$0xf]
    %v26 = vld [vmem:[%s0 + $0x4] sm:$0xf]
    %v27 = vld [vmem:[%s0 + $0x8] sm:$0xf]
    %v28 = vld [vmem:[%s0 + $0xc] sm:$0xf]
    %v29 = vld [vmem:[%s0 + $0x10] sm:$0xf]
    %v30 = vld [vmem:[%s0 + $0x14] sm:$0x1]
    %v31 = vunpack.c.l.bf16 %v25
    %v32 = vunpack.c.l.bf16 %v26
    %v33 = vunpack.c.l.bf16 %v27
    %v34 = vunpack.c.l.bf16 %v28
    %v35 = vunpack.c.l.bf16 %v29
    %v36 = vld [vmem:[%s1] sm:$0xf]
    %v37 = vld [vmem:[%s1 + $0x4] sm:$0xf]
    %v38 = vld [vmem:[%s1 + $0x8] sm:$0xf]
    %v39 = vld [vmem:[%s1 + $0xc] sm:$0xf]
    %v40 = vld [vmem:[%s1 + $0x10] sm:$0xf]
    %v41 = vld [vmem:[%s1 + $0x14] sm:$0xf]
    %v42 = vld [vmem:[%s1 + $0x18] sm:$0xf]
    %v43 = vld [vmem:[%s1 + $0x1c] sm:$0xf]
    %v44 = vld [vmem:[%s1 + $0x20] sm:$0xf]
    %v45 = vld [vmem:[%s1 + $0x24] sm:$0xf]
    %v46 = vld [vmem:[%s1 + $0x28] sm:$0xf]
    %v47 = vld [vmem:[%s1 + $0x2c] sm:$0xf]
    %v48 = vld [vmem:[%s1 + $0x30] sm:$0xf]
    %v49 = vld [vmem:[%s1 + $0x34] sm:$0xf]
    %v50 = vld [vmem:[%s1 + $0x38] sm:$0xf]
    %v51 = vld [vmem:[%s1 + $0x3c] sm:$0xf]
    %v52 = vld [vmem:[%s1 + $0x40] sm:$0xf]
    %v53 = vld [vmem:[%s1 + $0x44] sm:$0xf]
    %v54 = vld [vmem:[%s1 + $0x48] sm:$0xf]
    %v55 = vld [vmem:[%s1 + $0x4c] sm:$0xf]
    %v56 = vld [vmem:[%s1 + $0x50] sm:$0xf]
    %v57 = vld [vmem:[%s1 + $0x54] sm:$0xf]
    %v58 = vld [vmem:[%s1 + $0x58] sm:$0xf]
    %v59 = vld [vmem:[%s1 + $0x5c] sm:$0xf]
    %v60 = vld [vmem:[%s1 + $0x60] sm:$0xf]
    %v61 = vld [vmem:[%s1 + $0x64] sm:$0xf]
    %v62 = vld [vmem:[%s1 + $0x68] sm:$0xf]
    %v63 = vld [vmem:[%s1 + $0x6c] sm:$0xf]
    %v64 = vld [vmem:[%s1 + $0x70] sm:$0xf]
    %v65 = vld [vmem:[%s1 + $0x74] sm:$0xf]
    %v66 = vld [vmem:[%s1 + $0x78] sm:$0xf]
    %v67 = vld [vmem:[%s1 + $0x7c] sm:$0xf]
    %v68 = vld [vmem:[%s1 + $0x80] sm:$0xf]
    %v69 = vld [vmem:[%s1 + $0x84] sm:$0xf]
    %v70 = vld [vmem:[%s1 + $0x88] sm:$0xf]
    %v71 = vld [vmem:[%s1 + $0x8c] sm:$0xf]
    %v108 = vunpack.c.l.b16 %v36
    %v109 = vunpack.c.l.b16 %v37
    %v110 = vunpack.c.l.b16 %v38
    %v111 = vunpack.c.l.b16 %v39
    %v112 = vunpack.c.l.b16 %v40
    %v113 = vunpack.c.l.b16 %v41
    %v114 = vunpack.c.l.b16 %v42
    %v115 = vunpack.c.l.b16 %v43
    %v116 = vunpack.c.l.b16 %v44
    %v117 = vunpack.c.l.b16 %v45
    %v118 = vunpack.c.l.b16 %v46
    %v119 = vunpack.c.l.b16 %v47
    %v120 = vunpack.c.l.b16 %v48
    %v121 = vunpack.c.l.b16 %v49
    %v122 = vunpack.c.l.b16 %v50
    %v123 = vunpack.c.l.b16 %v51
    %v124 = vunpack.c.l.b16 %v52
    %v125 = vunpack.c.l.b16 %v53
    %v126 = vunpack.c.l.b16 %v54
    %v127 = vunpack.c.l.b16 %v55
    %v128 = vunpack.c.l.b16 %v56
    %v129 = vunpack.c.l.b16 %v57
    %v130 = vunpack.c.l.b16 %v58
    %v131 = vunpack.c.l.b16 %v59
    %v132 = vunpack.c.l.b16 %v60
    %v133 = vunpack.c.l.b16 %v61
    %v134 = vunpack.c.l.b16 %v62
    %v135 = vunpack.c.l.b16 %v63
    %v136 = vunpack.c.l.b16 %v64
    %v137 = vunpack.c.l.b16 %v65
    %v138 = vunpack.c.l.b16 %v66
    %v139 = vunpack.c.l.b16 %v67
    %v140 = vunpack.c.l.b16 %v68
    %v141 = vunpack.c.l.b16 %v69
    %v142 = vunpack.c.l.b16 %v70
    %v143 = vunpack.c.l.b16 %v71
    %v144 = vpack.c.b16 %v109, %v108
    %v145 = vpack.c.b16 %v111, %v110
    %v146 = vpack.c.b16 %v113, %v112
    %v147 = vpack.c.b16 %v115, %v114
    %v148 = vpack.c.b16 %v117, %v116
    %v149 = vpack.c.b16 %v119, %v118
    %v150 = vpack.c.b16 %v121, %v120
    %v151 = vpack.c.b16 %v123, %v122
    %v152 = vpack.c.b16 %v125, %v124
    %v153 = vpack.c.b16 %v127, %v126
    %v154 = vpack.c.b16 %v129, %v128
    %v155 = vpack.c.b16 %v131, %v130
    %v156 = vpack.c.b16 %v133, %v132
    %v157 = vpack.c.b16 %v135, %v134
    %v158 = vpack.c.b16 %v137, %v136
    %v159 = vpack.c.b16 %v139, %v138
    %v160 = vpack.c.b16 %v141, %v140
    %v161 = vpack.c.b16 %v143, %v142
    %v168 = vunpack.c.l.b16 %v25
    %v169 = vunpack.c.l.b16 %v26
    %v170 = vunpack.c.l.b16 %v27
    %v171 = vunpack.c.l.b16 %v28
    %v172 = vunpack.c.l.b16 %v29
    %v173 = vunpack.c.l.b16 %v30
    %v174 = vpack.c.b16 %v169, %v168
    %v175 = vpack.c.b16 %v171, %v170
    %v176 = vpack.c.b16 %v173, %v172
    %vm179 = vcmask 334848
    %v181 = vsel %vm179, %v144, 0
    %v184 = vsel %vm179, %v145, 0
    %v187 = vsel %vm179, %v146, 0
    %v190 = vsel %vm179, %v147, 0
    %v193 = vsel %vm179, %v148, 0
    %v196 = vsel %vm179, %v149, 0
    %v199 = vsel %vm179, %v150, 0
    %v202 = vsel %vm179, %v151, 0
    %v205 = vsel %vm179, %v152, 0
    %v208 = vsel %vm179, %v153, 0
    %v211 = vsel %vm179, %v154, 0
    %v214 = vsel %vm179, %v155, 0
    %v217 = vsel %vm179, %v156, 0
    %v220 = vsel %vm179, %v157, 0
    %v223 = vsel %vm179, %v158, 0
    %v226 = vsel %vm179, %v159, 0
    %v229 = vsel %vm179, %v160, 0
    %v232 = vsel %vm179, %v161, 0
    %vm234 = vcmask 1043456
    %vm235 = vcmask 1044480
    %v236 = vsel %vm234, 4294967295, 65535
    %v237 = vsel %vm235, %v236, 0
    %v239 = vand.u32 %v176, %v237
    %241 = vmatpush.bf16.msra.mxu0 0
    %242 = vmatpush.bf16.msra.mxu0 0
    %243 = vmatpush.bf16.msra.mxu0 0
    %244 = vmatpush.bf16.msra.mxu0 0
    %245 = vmatpush.bf16.msra.mxu0 0
    %246 = vmatpush.bf16.msra.mxu0 %v239
    %247 = vmatpush.bf16.msra.mxu0 %v175
    %248 = vmatpush.bf16.msra.mxu0 %v174
    %249 = vmatmul.bf16.gmra.mxu0 %v181
    %v250 = vpop.f32.mrf.mxu0
    %v251 = vadd.f32 0.0, %v250
    %v252 = vpop.f32.mrf.mxu0
    %v253 = vadd.f32 0.0, %v252
    %254 = vmatmul.bf16.gmra.mxu0 %v184
    %v255 = vpop.f32.mrf.mxu0
    %v256 = vadd.f32 0.0, %v255
    %v257 = vpop.f32.mrf.mxu0
    %v258 = vadd.f32 0.0, %v257
    %259 = vmatmul.bf16.gmra.mxu0 %v187
    %v260 = vpop.f32.mrf.mxu0
    %v261 = vadd.f32 0.0, %v260
    %v262 = vpop.f32.mrf.mxu0
    %v263 = vadd.f32 0.0, %v262
    %264 = vmatmul.bf16.gmra.mxu0 %v190
    %v265 = vpop.f32.mrf.mxu0
    %v266 = vadd.f32 0.0, %v265
    %v267 = vpop.f32.mrf.mxu0
    %v268 = vadd.f32 0.0, %v267
    %269 = vmatmul.bf16.gmra.mxu0 %v193
    %v270 = vpop.f32.mrf.mxu0
    %v271 = vadd.f32 0.0, %v270
    %v272 = vpop.f32.mrf.mxu0
    %v273 = vadd.f32 0.0, %v272
    %274 = vmatmul.bf16.gmra.mxu0 %v196
    %v275 = vpop.f32.mrf.mxu0
    %v276 = vadd.f32 0.0, %v275
    %v277 = vpop.f32.mrf.mxu0
    %v278 = vadd.f32 0.0, %v277
    %279 = vmatmul.bf16.gmra.mxu0 %v199
    %v280 = vpop.f32.mrf.mxu0
    %v281 = vadd.f32 0.0, %v280
    %v282 = vpop.f32.mrf.mxu0
    %v283 = vadd.f32 0.0, %v282
    %284 = vmatmul.bf16.gmra.mxu0 %v202
    %v285 = vpop.f32.mrf.mxu0
    %v286 = vadd.f32 0.0, %v285
    %v287 = vpop.f32.mrf.mxu0
    %v288 = vadd.f32 0.0, %v287
    %289 = vmatmul.bf16.gmra.mxu0 %v205
    %v290 = vpop.f32.mrf.mxu0
    %v291 = vadd.f32 0.0, %v290
    %v292 = vpop.f32.mrf.mxu0
    %v293 = vadd.f32 0.0, %v292
    %294 = vmatmul.bf16.gmra.mxu0 %v208
    %v295 = vpop.f32.mrf.mxu0
    %v296 = vadd.f32 0.0, %v295
    %v297 = vpop.f32.mrf.mxu0
    %v298 = vadd.f32 0.0, %v297
    %299 = vmatmul.bf16.gmra.mxu0 %v211
    %v300 = vpop.f32.mrf.mxu0
    %v301 = vadd.f32 0.0, %v300
    %v302 = vpop.f32.mrf.mxu0
    %v303 = vadd.f32 0.0, %v302
    %304 = vmatmul.bf16.gmra.mxu0 %v214
    %v305 = vpop.f32.mrf.mxu0
    %v306 = vadd.f32 0.0, %v305
    %v307 = vpop.f32.mrf.mxu0
    %v308 = vadd.f32 0.0, %v307
    %309 = vmatmul.bf16.gmra.mxu0 %v217
    %v310 = vpop.f32.mrf.mxu0
    %v311 = vadd.f32 0.0, %v310
    %v312 = vpop.f32.mrf.mxu0
    %v313 = vadd.f32 0.0, %v312
    %314 = vmatmul.bf16.gmra.mxu0 %v220
    %v315 = vpop.f32.mrf.mxu0
    %v316 = vadd.f32 0.0, %v315
    %v317 = vpop.f32.mrf.mxu0
    %v318 = vadd.f32 0.0, %v317
    %319 = vmatmul.bf16.gmra.mxu0 %v223
    %v320 = vpop.f32.mrf.mxu0
    %v321 = vadd.f32 0.0, %v320
    %v322 = vpop.f32.mrf.mxu0
    %v323 = vadd.f32 0.0, %v322
    %324 = vmatmul.bf16.gmra.mxu0 %v226
    %v325 = vpop.f32.mrf.mxu0
    %v326 = vadd.f32 0.0, %v325
    %v327 = vpop.f32.mrf.mxu0
    %v328 = vadd.f32 0.0, %v327
    %329 = vmatmul.bf16.gmra.mxu0 %v229
    %v330 = vpop.f32.mrf.mxu0
    %v331 = vadd.f32 0.0, %v330
    %v332 = vpop.f32.mrf.mxu0
    %v333 = vadd.f32 0.0, %v332
    %334 = vmatmul.bf16.gmra.mxu0 %v232
    %v335 = vpop.f32.mrf.mxu0
    %v336 = vadd.f32 0.0, %v335
    %v337 = vpop.f32.mrf.mxu0
    %v338 = vadd.f32 0.0, %v337
    %339 = vdwg.mxu0
    %v340 = vmax.f32 %v251, 0.0
    %v341 = vmax.f32 %v253, 0.0
    %v342 = vmax.f32 %v256, 0.0
    %v343 = vmax.f32 %v258, 0.0
    %v344 = vmax.f32 %v261, 0.0
    %v345 = vmax.f32 %v263, 0.0
    %v346 = vmax.f32 %v266, 0.0
    %v347 = vmax.f32 %v268, 0.0
    %v348 = vmax.f32 %v271, 0.0
    %v349 = vmax.f32 %v273, 0.0
    %v350 = vmax.f32 %v276, 0.0
    %v351 = vmax.f32 %v278, 0.0
    %v352 = vmax.f32 %v281, 0.0
    %v353 = vmax.f32 %v283, 0.0
    %v354 = vmax.f32 %v286, 0.0
    %v355 = vmax.f32 %v288, 0.0
    %v356 = vmax.f32 %v291, 0.0
    %v357 = vmax.f32 %v293, 0.0
    %v358 = vmax.f32 %v296, 0.0
    %v359 = vmax.f32 %v298, 0.0
    %v360 = vmax.f32 %v301, 0.0
    %v361 = vmax.f32 %v303, 0.0
    %v362 = vmax.f32 %v306, 0.0
    %v363 = vmax.f32 %v308, 0.0
    %v364 = vmax.f32 %v311, 0.0
    %v365 = vmax.f32 %v313, 0.0
    %v366 = vmax.f32 %v316, 0.0
    %v367 = vmax.f32 %v318, 0.0
    %v368 = vmax.f32 %v321, 0.0
    %v369 = vmax.f32 %v323, 0.0
    %v370 = vmax.f32 %v326, 0.0
    %v371 = vmax.f32 %v328, 0.0
    %v372 = vmax.f32 %v331, 0.0
    %v373 = vmax.f32 %v333, 0.0
    %v374 = vmax.f32 %v336, 0.0
    %v375 = vmax.f32 %v338, 0.0
    %v376 = vpack.c.bf16 %v341, %v340
    %v377 = vpack.c.bf16 %v343, %v342
    %v378 = vpack.c.bf16 %v345, %v344
    %v379 = vpack.c.bf16 %v347, %v346
    %v380 = vpack.c.bf16 %v349, %v348
    %v381 = vpack.c.bf16 %v351, %v350
    %v382 = vpack.c.bf16 %v353, %v352
    %v383 = vpack.c.bf16 %v355, %v354
    %v384 = vpack.c.bf16 %v357, %v356
    %v385 = vpack.c.bf16 %v359, %v358
    %v386 = vpack.c.bf16 %v361, %v360
    %v387 = vpack.c.bf16 %v363, %v362
    %v388 = vpack.c.bf16 %v365, %v364
    %v389 = vpack.c.bf16 %v367, %v366
    %v390 = vpack.c.bf16 %v369, %v368
    %v391 = vpack.c.bf16 %v371, %v370
    %v392 = vpack.c.bf16 %v373, %v372
    %v393 = vpack.c.bf16 %v375, %v374
    %v394 = vld [vmem:[%s2] sm:$0xff]
    %v395 = vld [vmem:[%s2 + $0x8] sm:$0xf]
    %v396 = vld [vmem:[%s2 + $0xc] sm:$0xff]
    %v397 = vld [vmem:[%s2 + $0x14] sm:$0xf]
    %v398 = vld [vmem:[%s2 + $0x18] sm:$0xff]
    %v399 = vld [vmem:[%s2 + $0x20] sm:$0xf]
    %v400 = vld [vmem:[%s3] sm:$0xff]
    %v401 = vld [vmem:[%s3 + $0x8] sm:$0xff]
    %v402 = vld [vmem:[%s3 + $0x10] sm:$0xff]
    %404 = vset.pattern.permute.xlu0 0
    %405 = vperm.xlu0 %404, %v400
    %v406 = vpop.permute.xlu0 %405
    %409 = vset.pattern.permute.xlu0 0
    %410 = vperm.xlu0 %409, %v401
    %v411 = vpop.permute.xlu0 %410
    %414 = vset.pattern.permute.xlu0 0
    %415 = vperm.xlu0 %414, %v402
    %v416 = vpop.permute.xlu0 %415
    %v424 = vunpack.c.l.b16 %v394
    %v425 = vunpack.c.h.b16 %v394
    %v426 = vunpack.c.l.b16 %v395
    %v427 = vunpack.c.l.b16 %v396
    %v428 = vunpack.c.h.b16 %v396
    %v429 = vunpack.c.l.b16 %v397
    %v430 = vunpack.c.l.b16 %v398
    %v431 = vunpack.c.h.b16 %v398
    %v432 = vunpack.c.l.b16 %v399
    %v433 = vpack.c.b16 %v427, %v424
    %v434 = vpack.c.b16 %v428, %v425
    %v435 = vpack.c.b16 %v429, %v426
    %v436 = vpack.c.b16 %v430, %v430
    %v437 = vpack.c.b16 %v431, %v431
    %v438 = vpack.c.b16 %v432, %v432
    %vm443 = vcmask 261120
    %v445 = vsel %vm443, %v435, 0
    %v448 = vsel %vm443, %v438, 0
    %450 = vmatpush.bf16.msra.mxu0 %v383
    %451 = vmatpush.bf16.msra.mxu0 %v382
    %452 = vmatpush.bf16.msra.mxu0 %v381
    %453 = vmatpush.bf16.msra.mxu0 %v380
    %454 = vmatpush.bf16.msra.mxu0 %v379
    %455 = vmatpush.bf16.msra.mxu0 %v378
    %456 = vmatpush.bf16.msra.mxu0 %v377
    %457 = vmatpush.bf16.msra.mxu0 %v376
    %458 = vmatmul.bf16.gmra.mxu0 %v433
    %v459 = vpop.f32.mrf.mxu0
    %v460 = vadd.f32 %v406, %v459
    %v461 = vpop.f32.mrf.mxu0
    %v462 = vadd.f32 %v411, %v461
    %463 = vmatmul.bf16.gmra.mxu0 %v436
    %v464 = vpop.f32.mrf.mxu0
    %v465 = vadd.f32 %v416, %v464
    %v466 = vpop.f32.mrf.mxu0
    %467 = vdwg.mxu0
    %468 = vmatpush.bf16.msra.mxu0 %v391
    %469 = vmatpush.bf16.msra.mxu0 %v390
    %470 = vmatpush.bf16.msra.mxu0 %v389
    %471 = vmatpush.bf16.msra.mxu0 %v388
    %472 = vmatpush.bf16.msra.mxu0 %v387
    %473 = vmatpush.bf16.msra.mxu0 %v386
    %474 = vmatpush.bf16.msra.mxu0 %v385
    %475 = vmatpush.bf16.msra.mxu0 %v384
    %476 = vmatmul.bf16.gmra.mxu0 %v434
    %v477 = vpop.f32.mrf.mxu0
    %v478 = vadd.f32 %v460, %v477
    %v479 = vpop.f32.mrf.mxu0
    %v480 = vadd.f32 %v462, %v479
    %481 = vmatmul.bf16.gmra.mxu0 %v437
    %v482 = vpop.f32.mrf.mxu0
    %v483 = vadd.f32 %v465, %v482
    %v484 = vpop.f32.mrf.mxu0
    %485 = vdwg.mxu0
    %486 = vmatpush.bf16.msra.mxu0 0
    %487 = vmatpush.bf16.msra.mxu0 0
    %488 = vmatpush.bf16.msra.mxu0 0
    %489 = vmatpush.bf16.msra.mxu0 0
    %490 = vmatpush.bf16.msra.mxu0 0
    %491 = vmatpush.bf16.msra.mxu0 0
    %492 = vmatpush.bf16.msra.mxu0 %v393
    %493 = vmatpush.bf16.msra.mxu0 %v392
    %494 = vmatmul.bf16.gmra.mxu0 %v445
    %v495 = vpop.f32.mrf.mxu0
    %v496 = vadd.f32 %v478, %v495
    %v497 = vpop.f32.mrf.mxu0
    %v498 = vadd.f32 %v480, %v497
    %499 = vmatmul.bf16.gmra.mxu0 %v448
    %v500 = vpop.f32.mrf.mxu0
    %v501 = vadd.f32 %v483, %v500
    %v502 = vpop.f32.mrf.mxu0
    %503 = vdwg.mxu0
    %v504 = vld [vmem:[%s4] sm:$0xf]
    %v505 = vld [vmem:[%s4 + $0x4] sm:$0xf]
    %v506 = vld [vmem:[%s4 + $0x8] sm:$0xf]
    %v507 = vld [vmem:[%s4 + $0xc] sm:$0xf]
    %v508 = vld [vmem:[%s4 + $0x10] sm:$0xf]
    %v509 = vld [vmem:[%s4 + $0x14] sm:$0xf]
    %v510 = vld [vmem:[%s4 + $0x18] sm:$0xf]
    %v511 = vld [vmem:[%s4 + $0x1c] sm:$0xf]
    %v512 = vld [vmem:[%s4 + $0x20] sm:$0xf]
    %v513 = vld [vmem:[%s4 + $0x24] sm:$0xf]
    %v514 = vld [vmem:[%s4 + $0x28] sm:$0xf]
    %v515 = vld [vmem:[%s4 + $0x2c] sm:$0xf]
    %v516 = vld [vmem:[%s4 + $0x30] sm:$0xf]
    %v517 = vld [vmem:[%s4 + $0x34] sm:$0xf]
    %v518 = vld [vmem:[%s4 + $0x38] sm:$0xf]
    %v519 = vld [vmem:[%s4 + $0x3c] sm:$0xf]
    %v520 = vld [vmem:[%s4 + $0x40] sm:$0xf]
    %v521 = vld [vmem:[%s4 + $0x44] sm:$0xf]
    %v522 = vld [vmem:[%s4 + $0x48] sm:$0xf]
    %v523 = vld [vmem:[%s4 + $0x4c] sm:$0xf]
    %v524 = vpack.c.bf16 %v498, %v496
    %v525 = vpack.c.bf16 %v501, %v501
    %v546 = vunpack.c.l.b16 %v504
    %v547 = vunpack.c.l.b16 %v505
    %v548 = vunpack.c.l.b16 %v506
    %v549 = vunpack.c.l.b16 %v507
    %v550 = vunpack.c.l.b16 %v508
    %v551 = vunpack.c.l.b16 %v509
    %v552 = vunpack.c.l.b16 %v510
    %v553 = vunpack.c.l.b16 %v511
    %v554 = vunpack.c.l.b16 %v512
    %v555 = vunpack.c.l.b16 %v513
    %v556 = vunpack.c.l.b16 %v514
    %v557 = vunpack.c.l.b16 %v515
    %v558 = vunpack.c.l.b16 %v516
    %v559 = vunpack.c.l.b16 %v517
    %v560 = vunpack.c.l.b16 %v518
    %v561 = vunpack.c.l.b16 %v519
    %v562 = vunpack.c.l.b16 %v520
    %v563 = vunpack.c.l.b16 %v521
    %v564 = vunpack.c.l.b16 %v522
    %v565 = vunpack.c.l.b16 %v523
    %v566 = vpack.c.b16 %v547, %v546
    %v567 = vpack.c.b16 %v549, %v548
    %v568 = vpack.c.b16 %v551, %v550
    %v569 = vpack.c.b16 %v553, %v552
    %v570 = vpack.c.b16 %v555, %v554
    %v571 = vpack.c.b16 %v557, %v556
    %v572 = vpack.c.b16 %v559, %v558
    %v573 = vpack.c.b16 %v561, %v560
    %v574 = vpack.c.b16 %v563, %v562
    %v575 = vpack.c.b16 %v565, %v564
    %vm576 = vcmask 195584
    %v578 = vsel %vm576, %v566, 0
    %v581 = vsel %vm576, %v567, 0
    %v584 = vsel %vm576, %v568, 0
    %v587 = vsel %vm576, %v569, 0
    %v590 = vsel %vm576, %v570, 0
    %v593 = vsel %vm576, %v571, 0
    %v596 = vsel %vm576, %v572, 0
    %v599 = vsel %vm576, %v573, 0
    %v602 = vsel %vm576, %v574, 0
    %v605 = vsel %vm576, %v575, 0
    %v608 = vsel %vm234, %v525, 0
    %610 = vmatpush.bf16.msra.mxu0 0
    %611 = vmatpush.bf16.msra.mxu0 0
    %612 = vmatpush.bf16.msra.mxu0 0
    %613 = vmatpush.bf16.msra.mxu0 0
    %614 = vmatpush.bf16.msra.mxu0 0
    %615 = vmatpush.bf16.msra.mxu0 0
    %616 = vmatpush.bf16.msra.mxu0 %v608
    %617 = vmatpush.bf16.msra.mxu0 %v524
    %618 = vmatmul.bf16.gmra.mxu0 %v578
    %v619 = vpop.f32.mrf.mxu0
    %v620 = vadd.f32 0.0, %v619
    %v621 = vpop.f32.mrf.mxu0
    %v622 = vadd.f32 0.0, %v621
    %623 = vmatmul.bf16.gmra.mxu0 %v581
    %v624 = vpop.f32.mrf.mxu0
    %v625 = vadd.f32 0.0, %v624
    %v626 = vpop.f32.mrf.mxu0
    %v627 = vadd.f32 0.0, %v626
    %628 = vmatmul.bf16.gmra.mxu0 %v584
    %v629 = vpop.f32.mrf.mxu0
    %v630 = vadd.f32 0.0, %v629
    %v631 = vpop.f32.mrf.mxu0
    %v632 = vadd.f32 0.0, %v631
    %633 = vmatmul.bf16.gmra.mxu0 %v587
    %v634 = vpop.f32.mrf.mxu0
    %v635 = vadd.f32 0.0, %v634
    %v636 = vpop.f32.mrf.mxu0
    %v637 = vadd.f32 0.0, %v636
    %638 = vmatmul.bf16.gmra.mxu0 %v590
    %v639 = vpop.f32.mrf.mxu0
    %v640 = vadd.f32 0.0, %v639
    %v641 = vpop.f32.mrf.mxu0
    %v642 = vadd.f32 0.0, %v641
    %643 = vmatmul.bf16.gmra.mxu0 %v593
    %v644 = vpop.f32.mrf.mxu0
    %v645 = vadd.f32 0.0, %v644
    %v646 = vpop.f32.mrf.mxu0
    %v647 = vadd.f32 0.0, %v646
    %648 = vmatmul.bf16.gmra.mxu0 %v596
    %v649 = vpop.f32.mrf.mxu0
    %v650 = vadd.f32 0.0, %v649
    %v651 = vpop.f32.mrf.mxu0
    %v652 = vadd.f32 0.0, %v651
    %653 = vmatmul.bf16.gmra.mxu0 %v599
    %v654 = vpop.f32.mrf.mxu0
    %v655 = vadd.f32 0.0, %v654
    %v656 = vpop.f32.mrf.mxu0
    %v657 = vadd.f32 0.0, %v656
    %658 = vmatmul.bf16.gmra.mxu0 %v602
    %v659 = vpop.f32.mrf.mxu0
    %v660 = vadd.f32 0.0, %v659
    %v661 = vpop.f32.mrf.mxu0
    %v662 = vadd.f32 0.0, %v661
    %663 = vmatmul.bf16.gmra.mxu0 %v605
    %v664 = vpop.f32.mrf.mxu0
    %v665 = vadd.f32 0.0, %v664
    %v666 = vpop.f32.mrf.mxu0
    %v667 = vadd.f32 0.0, %v666
    %668 = vdwg.mxu0
    %v669 = vld [vmem:[%s5] sm:$0xf]
    %v670 = vmul.f32 %v620, %v31
    %v671 = vmul.f32 %v622, %v32
    %v672 = vmul.f32 %v625, %v33
    %v673 = vmul.f32 %v627, %v34
    %v674 = vpack.c.bf16 %v671, %v670
    %v675 = vpack.c.bf16 %v673, %v672
    %v677 = vsel %vm443, %v669, 0
    %679 = vmatpush.bf16.msra.mxu0 0
    %680 = vmatpush.bf16.msra.mxu0 0
    %681 = vmatpush.bf16.msra.mxu0 0
    %682 = vmatpush.bf16.msra.mxu0 0
    %683 = vmatpush.bf16.msra.mxu0 0
    %684 = vmatpush.bf16.msra.mxu0 0
    %685 = vmatpush.bf16.msra.mxu0 %v675
    %686 = vmatpush.bf16.msra.mxu0 %v674
    %687 = vmatmul.bf16.gmra.mxu0 %v677
    %v688 = vpop.f32.mrf.mxu0
    %v689 = vadd.f32 %v660, %v688
    %v690 = vpop.f32.mrf.mxu0
    %691 = vdwg.mxu0
    %v692 = vrot.slane %v689, 4
    %v693 = vmax.f32 %v689, %v692
    %v694 = vrot.slane %v693, 2
    %v695 = vmax.f32 %v693, %v694
    %v696 = vrot.slane %v695, 1
    %v697 = vmax.f32 %v695, %v696
    %v698 = vsub.f32 %v689, %v697
    %v699 = vmul.f32 %v698, 1.442695
    %v700 = vpow.pop %v699
    %v701 = vrot.slane %v700, 4
    %v702 = vadd.f32 %v700, %v701
    %v703 = vrot.slane %v702, 2
    %v704 = vadd.f32 %v702, %v703
    %v705 = vrot.slane %v704, 1
    %v706 = vadd.f32 %v704, %v705
    %v707 = vrcp.pop %v706
    %v708 = vmul.f32 %v700, %v707
    %v709 = vmul.f32 %v630, %v31
    %v710 = vmul.f32 %v632, %v32
    %v711 = vmul.f32 %v635, %v33
    %v712 = vmul.f32 %v637, %v34
    %v713 = vpack.c.bf16 %v710, %v709
    %v714 = vpack.c.bf16 %v712, %v711
    %715 = vmatpush.bf16.msra.mxu0 0
    %716 = vmatpush.bf16.msra.mxu0 0
    %717 = vmatpush.bf16.msra.mxu0 0
    %718 = vmatpush.bf16.msra.mxu0 0
    %719 = vmatpush.bf16.msra.mxu0 0
    %720 = vmatpush.bf16.msra.mxu0 0
    %721 = vmatpush.bf16.msra.mxu0 %v714
    %722 = vmatpush.bf16.msra.mxu0 %v713
    %723 = vmatmul.bf16.gmra.mxu0 %v677
    %v724 = vpop.f32.mrf.mxu0
    %v725 = vadd.f32 %v662, %v724
    %v726 = vpop.f32.mrf.mxu0
    %727 = vdwg.mxu0
    %v728 = vrot.slane %v725, 4
    %v729 = vmax.f32 %v725, %v728
    %v730 = vrot.slane %v729, 2
    %v731 = vmax.f32 %v729, %v730
    %v732 = vrot.slane %v731, 1
    %v733 = vmax.f32 %v731, %v732
    %v734 = vsub.f32 %v725, %v733
    %v735 = vmul.f32 %v734, 1.442695
    %v736 = vpow.pop %v735
    %v737 = vrot.slane %v736, 4
    %v738 = vadd.f32 %v736, %v737
    %v739 = vrot.slane %v738, 2
    %v740 = vadd.f32 %v738, %v739
    %v741 = vrot.slane %v740, 1
    %v742 = vadd.f32 %v740, %v741
    %v743 = vrcp.pop %v742
    %v744 = vmul.f32 %v736, %v743
    %v745 = vadd.f32 %v708, %v744
    %v746 = vmul.f32 %v640, %v31
    %v747 = vmul.f32 %v642, %v32
    %v748 = vmul.f32 %v645, %v33
    %v749 = vmul.f32 %v647, %v34
    %v750 = vpack.c.bf16 %v747, %v746
    %v751 = vpack.c.bf16 %v749, %v748
    %752 = vmatpush.bf16.msra.mxu0 0
    %753 = vmatpush.bf16.msra.mxu0 0
    %754 = vmatpush.bf16.msra.mxu0 0
    %755 = vmatpush.bf16.msra.mxu0 0
    %756 = vmatpush.bf16.msra.mxu0 0
    %757 = vmatpush.bf16.msra.mxu0 0
    %758 = vmatpush.bf16.msra.mxu0 %v751
    %759 = vmatpush.bf16.msra.mxu0 %v750
    %760 = vmatmul.bf16.gmra.mxu0 %v677
    %v761 = vpop.f32.mrf.mxu0
    %v762 = vadd.f32 %v665, %v761
    %v763 = vpop.f32.mrf.mxu0
    %764 = vdwg.mxu0
    %v765 = vrot.slane %v762, 4
    %v766 = vmax.f32 %v762, %v765
    %v767 = vrot.slane %v766, 2
    %v768 = vmax.f32 %v766, %v767
    %v769 = vrot.slane %v768, 1
    %v770 = vmax.f32 %v768, %v769
    %v771 = vsub.f32 %v762, %v770
    %v772 = vmul.f32 %v771, 1.442695
    %v773 = vpow.pop %v772
    %v774 = vrot.slane %v773, 4
    %v775 = vadd.f32 %v773, %v774
    %v776 = vrot.slane %v775, 2
    %v777 = vadd.f32 %v775, %v776
    %v778 = vrot.slane %v777, 1
    %v779 = vadd.f32 %v777, %v778
    %v780 = vrcp.pop %v779
    %v781 = vmul.f32 %v773, %v780
    %v782 = vadd.f32 %v745, %v781
    %v783 = vmul.f32 %v650, %v31
    %v784 = vmul.f32 %v652, %v32
    %v785 = vmul.f32 %v655, %v33
    %v786 = vmul.f32 %v657, %v34
    %v787 = vpack.c.bf16 %v784, %v783
    %v788 = vpack.c.bf16 %v786, %v785
    %789 = vmatpush.bf16.msra.mxu0 0
    %790 = vmatpush.bf16.msra.mxu0 0
    %791 = vmatpush.bf16.msra.mxu0 0
    %792 = vmatpush.bf16.msra.mxu0 0
    %793 = vmatpush.bf16.msra.mxu0 0
    %794 = vmatpush.bf16.msra.mxu0 0
    %795 = vmatpush.bf16.msra.mxu0 %v788
    %796 = vmatpush.bf16.msra.mxu0 %v787
    %797 = vmatmul.bf16.gmra.mxu0 %v677
    %v798 = vpop.f32.mrf.mxu0
    %v799 = vadd.f32 %v667, %v798
    %v800 = vpop.f32.mrf.mxu0
    %801 = vdwg.mxu0
    %v802 = vrot.slane %v799, 4
    %v803 = vmax.f32 %v799, %v802
    %v804 = vrot.slane %v803, 2
    %v805 = vmax.f32 %v803, %v804
    %v806 = vrot.slane %v805, 1
    %v807 = vmax.f32 %v805, %v806
    %v808 = vsub.f32 %v799, %v807
    %v809 = vmul.f32 %v808, 1.442695
    %v810 = vpow.pop %v809
    %v811 = vrot.slane %v810, 4
    %v812 = vadd.f32 %v810, %v811
    %v813 = vrot.slane %v812, 2
    %v814 = vadd.f32 %v812, %v813
    %v815 = vrot.slane %v814, 1
    %v816 = vadd.f32 %v814, %v815
    %v817 = vrcp.pop %v816
    %v818 = vmul.f32 %v810, %v817
    %v819 = vadd.f32 %v782, %v818
    %v820 = vmul.f32 %v819, %v35
    %v821 = vrot.slane %v820, 4
    %v822 = vadd.f32 %v820, %v821
    %v823 = vrot.slane %v822, 2
    %v824 = vadd.f32 %v822, %v823
    %v825 = vrot.slane %v824, 1
    %v826 = vadd.f32 %v824, %v825
    %v827 = vadd.f32 %v826, %v501
    %828 = vst [vmem:[#allocation2 - $0x4] sm:$0x10] %v827
    // Predicated region
    $region26: #{tpu_custom_call.1} parent=1 // pred_check
      _
    $region27: #{tpu_custom_call.1} parent=1 // pred_check_branch
      %830 = sbr.rel (0) target = $region29
    $region28: #{tpu_custom_call.1} parent=1 // pred_region
      %832 = vsyncadd [#allocation3], 0
      %s834 = sshll.u32 [#allocation2], 4
      %s835 = int_to_ptr.vmem [resolvable:$true] %s834
      %s836 = sshll.u32 %s6, 4
      %s837 = int_to_ptr.hbm [resolvable:$true] %s836
      %839 = dma.vmem_to_hbm [thread:$0]  %s835, 16, %s837, [#allocation3]
    $region29: #{tpu_custom_call.1} parent=1 // pred_fallthru
      _
    // Predicated region
    $region30: #{tpu_custom_call.1} parent=1 // pred_check
      _
    $region31: #{tpu_custom_call.1} parent=1 // pred_check_branch
      %841 = sbr.rel (0) target = $region33
    $region32: #{tpu_custom_call.1} parent=1 // pred_region
      %843 = dma.done [#allocation3], 16
    $region33: #{tpu_custom_call.1} parent=1 // pred_fallthru
      _
    %844 = vsyncpa [#allocation3], 1

</llo_original>
